<compile_context>
chip_gen: v6e
topology: v6e:2x2x1
jax: 0.10.0
libtpu: 0.0.40
codegen_flags: <defaults>
</compile_context>

<pallas_src>
import jax
import jax.numpy as jnp
from jax.experimental import pallas as pl
from jax.experimental.pallas import tpu as pltpu

_ROW_TARGET = 256    # multiple of 8/16/32 -> valid sublane tile for any dtype
_LANE = 128
_LANE_TARGET = 1024  # lane tile target; keeps blocks ~1 MiB for f32


def _chomp_copy_kernel(x_ref, o_ref):
    # Input and output blocks map to identical element windows, so the hot
    # path is a single full-tile VMEM copy.
    o_ref[...] = x_ref[...]


def chomp1d(x: jax.Array, chomp_size: int) -> jax.Array:
    """Drop the last `chomp_size` entries along the last axis of an (N, C, L) array."""
    n, c, l = x.shape
    assert 0 <= chomp_size < l, "chomp_size must be in [0, L)"
    if chomp_size == 0:
        # Treated as identity (the common TCN usage never hits chomp_size==0).
        return x

    out_len = l - chomp_size
    r = n * c

    # Row (sublane) tile: full extent if small, otherwise a multiple of 8.
    rt = r if r <= _ROW_TARGET else _ROW_TARGET
    # Lane tile: always a multiple of 128 so it is legal for BOTH the input
    # (full lane dim L) and the output (full lane dim out_len) BlockSpecs.
    lt = min(_LANE_TARGET, ((out_len + _LANE - 1) // _LANE) * _LANE)

    grid = (pl.cdiv(r, rt), pl.cdiv(out_len, lt))

    x2d = x.reshape(r, l)  # free: merges leading contiguous axes

    out2d = pl.pallas_call(
        _chomp_copy_kernel,
        out_shape=jax.ShapeDtypeStruct((r, out_len), x.dtype),
        grid_spec=pltpu.PrefetchScalarGridSpec(
            num_scalar_prefetch=0,
            grid=grid,
            # Same block shape + index_map for input and output: only the
            # first out_len columns of x are ever covered by useful stores;
            # boundary tiles get padded reads / masked writes automatically.
            in_specs=[pl.BlockSpec((rt, lt), lambda i, j: (i, j))],
            out_specs=pl.BlockSpec((rt, lt), lambda i, j: (i, j)),
        ),
        compiler_params=pltpu.CompilerParams(
            dimension_semantics=("parallel", "parallel"),
            vmem_limit_bytes=32 * 1024 * 1024,
        ),
    )(x2d)

    return out2d.reshape(n, c, out_len)


if __name__ == "__main__":
    key = jax.random.PRNGKey(0)
    N, C, L = 2, 4, 16
    chomp_size = 3

    x = jax.random.normal(key, (N, C, L), dtype=jnp.float32)

    y = chomp1d(x, chomp_size)
    y = jax.block_until_ready(y)

    # Reference check against plain JAX slicing (== x[:, :, :-chomp_size]).
    y_ref = x[:, :, : L - chomp_size]
    assert y.shape == (N, C, L - chomp_size), y.shape
    assert jnp.array_equal(y, y_ref), "mismatch vs reference slice"

    # Larger, non-aligned shape to exercise row/lane tiling and the partial
    # boundary tiles (out_len not a multiple of 128, R not a multiple of 8).
    N2, C2, L2, ch2 = 3, 7, 1003, 3
    x2 = jax.random.normal(jax.random.PRNGKey(1), (N2, C2, L2), dtype=jnp.float32)
    y2 = jax.block_until_ready(chomp1d(x2, ch2))
    assert jnp.array_equal(y2, x2[:, :, : L2 - ch2]), "mismatch on tiled case"

    # Shape large enough to need multiple row tiles and multiple lane tiles.
    N3, C3, L3, ch3 = 8, 64, 2051, 4
    x3 = jax.random.normal(jax.random.PRNGKey(2), (N3, C3, L3), dtype=jnp.float32)
    y3 = jax.block_until_ready(chomp1d(x3, ch3))
    assert jnp.array_equal(y3, x3[:, :, : L3 - ch3]), "mismatch on large case"

    print("KERNEL_OK")
</pallas_src>

<mosaic_0001>
module attributes {stable_mosaic.version = 11 : i64} {
  func.func @_chomp_copy_kernel(%arg0: i32, %arg1: i32, %arg2: memref<8x128xf32, #tpu.memory_space<vmem>>, %arg3: memref<8x128xf32, #tpu.memory_space<vmem>>) attributes {dimension_semantics = [#tpu.dimension_semantics<parallel>, #tpu.dimension_semantics<parallel>], iteration_bounds = array<i64: 1, 1>, scalar_prefetch = 0 : i64, scratch_operands = 0 : i64, tpu.core_type = #tpu.core_type<tc>, window_params = [{transform_indices = @transform_0, window_bounds = array<i64: 8, 128>}, {transform_indices = @transform_1, window_bounds = array<i64: 8, 128>}]} {
    %c0 = arith.constant 0 : index
    %c0_0 = arith.constant 0 : index
    %0 = vector.load %arg2[%c0, %c0_0] : memref<8x128xf32, #tpu.memory_space<vmem>>, vector<8x128xf32>
    %c0_1 = arith.constant 0 : index
    %c0_2 = arith.constant 0 : index
    %1 = vector.load %arg3[%c0_1, %c0_2] : memref<8x128xf32, #tpu.memory_space<vmem>>, vector<8x128xf32>
    tpu.vector_store %arg3[%c0_1, %c0_2], %0 {strides = array<i32>} : memref<8x128xf32, #tpu.memory_space<vmem>>, vector<8x128xf32>,
    return
  }
  func.func @transform_0(%arg0: i32, %arg1: i32) -> (i32, i32) {
    %c0_i32 = arith.constant 0 : i32
    return %arg0, %arg1 : i32, i32
  }
  func.func @transform_1(%arg0: i32, %arg1: i32) -> (i32, i32) {
    %c0_i32 = arith.constant 0 : i32
    return %arg0, %arg1 : i32, i32
  }
}

</mosaic_0001>

<llo_original>
// kernel: tpu_custom_call.1
$region0: #{tpu_custom_call.1}
  #allocation0 [shape = 'u32[]', space=smem, size = 0x4, offset = 0x4, fixed_abs, tag = 'smem constant byte address 0x4 - core index']
  #allocation1 [shape = 'u32[144,128]{1,0:T(1,128)}', space=vmem, size = 0x12000, scoped, tag = 'internal scratch']
  %s0 = inlined_call_operand.hbm [shape: f32[8,16], index: 0, kind: input, shape index: {}]
  %s1 = inlined_call_operand.hbm [shape: f32[8,13], index: 1, kind: output, shape index: {}]
  %s2 = sld [smem:[#allocation0]]
  $region18: #{tpu_custom_call.1} parent=0
    _
  %s4 = ssub.s32 1, %s2
  %s5 = scalar_select 0, %s4, %s2
  $region1: #{tpu_custom_call.1} parent=0
    #allocation2 [shape = 'u8[4096]{0}', space=vmem, size = 0x1000, scoped, tag = 'input window, operand 0, single buffered']
    #allocation3 [shape = 's32[1]{0}', space=sflag, size = 0x4, scoped, tag = 'scoped memory for tpu_custom_call.1']
    #allocation4 [shape = 's32[1]{0}', space=sflag, size = 0x4, scoped, tag = 'scoped memory for tpu_custom_call.1']
    #allocation5 [shape = 'u8[4096]{0}', space=vmem, size = 0x1000, scoped, tag = 'output window, operand 0, single buffered']
    %6 = vsyncpa [#allocation3], 0
    %7 = vsyncpa [#allocation4], 0
    // Predicated region
    $region2: #{tpu_custom_call.1} parent=1 // pred_check
      _
    $region3: #{tpu_custom_call.1} parent=1 // pred_check_branch
      %9 = sbr.rel (0) target = $region5
    $region4: #{tpu_custom_call.1} parent=1 // pred_region
      %s11 = ssub.s32 128, 128
      %12 = vsyncadd [#allocation3], %s11
      %s14 = sshll.u32 [#allocation2], 4
      %s15 = int_to_ptr.vmem [resolvable:$true] %s14
      %17 = dma.hbm_to_vmem [thread:$0]  %s0, 128, %s15, [#allocation3]
    $region5: #{tpu_custom_call.1} parent=1 // pred_fallthru
      _
    // Predicated region
    $region6: #{tpu_custom_call.1} parent=1 // pred_check
      _
    $region7: #{tpu_custom_call.1} parent=1 // pred_check_branch
      %19 = sbr.rel (0) target = $region9
    $region8: #{tpu_custom_call.1} parent=1 // pred_region
      %20 = dma.done [#allocation3], 128
    $region9: #{tpu_custom_call.1} parent=1 // pred_fallthru
      _
    %v21 = vld [vmem:[#allocation2] sm:$0xff]
    %22 = vst [vmem:[#allocation5] sm:$0xff] %v21
    // Predicated region
    $region10: #{tpu_custom_call.1} parent=1 // pred_check
      _
    $region11: #{tpu_custom_call.1} parent=1 // pred_check_branch
      %24 = sbr.rel (0) target = $region13
    $region12: #{tpu_custom_call.1} parent=1 // pred_region
      %s26 = ssub.s32 128, 128
      %27 = vsyncadd [#allocation4], %s26
      %s29 = sshll.u32 [#allocation5], 4
      %s30 = int_to_ptr.vmem [resolvable:$true] %s29
      %32 = dma.vmem_to_hbm [thread:$0]  %s30, 128, %s1, [#allocation4]
    $region13: #{tpu_custom_call.1} parent=1 // pred_fallthru
      _
    // Predicated region
    $region14: #{tpu_custom_call.1} parent=1 // pred_check
      _
    $region15: #{tpu_custom_call.1} parent=1 // pred_check_branch
      %34 = sbr.rel (0) target = $region17
    $region16: #{tpu_custom_call.1} parent=1 // pred_region
      %35 = dma.done [#allocation4], 128
    $region17: #{tpu_custom_call.1} parent=1 // pred_fallthru
      _
    %36 = vsyncpa [#allocation3], 1
    %37 = vsyncpa [#allocation4], 1

</llo_original>
